<compile_context>
chip_gen: v6e
topology: v6e:2x2x1
jax: 0.10.0
libtpu: 0.0.40
codegen_flags: <defaults>
</compile_context>

<pallas_src>
import functools

import jax
import jax.numpy as jnp
from jax.experimental import pallas as pl
from jax.experimental.pallas import tpu as pltpu

IGNORE_INDEX = 255
SMOOTH = 1.0
NUM_CLASSES = 4
MAX_TILE_ROWS = 2048  # sublane-rows of 128 pixels per grid step (256K pixels, 4 MiB f32)


def _dice_partial_kernel(logits_ref, labels_ref, out_ref, acc_ref, *,
                         num_classes, ignore_index, rows, tile_rows,
                         tiles_per_split, need_row_mask):
    """Accumulates (intersection, sum_true + sum_pred) for one (split, batch) slice.

    logits_ref: (C, S, 128) float  -- C dense pixel planes
    labels_ref: (1, S, 128) int
    out_ref:    (2, 128) float32   -- written only in the last-tile epilogue
    acc_ref:    (2, 8, 128) float32 scratch, resident across the tile axis
    """
    ti = pl.program_id(2)

    @pl.when(ti == 0)
    def _():
        acc_ref[...] = jnp.zeros_like(acc_ref)

    lab = labels_ref[0].astype(jnp.int32)                         # (S, 128)

    if need_row_mask:
        # Ragged tile range (tile overhang / split overhang): mask out-of-range rows.
        gt = pl.program_id(0) * tiles_per_split + ti              # global tile index
        row = jax.lax.broadcasted_iota(jnp.int32, lab.shape, 0)   # (S, 128)
        in_bounds = (gt * tile_rows + row) < rows
        valid = jnp.logical_and(lab != ignore_index, in_bounds)
    else:
        valid = lab != ignore_index
    valid_f = valid.astype(jnp.float32)                           # (S, 128)

    # Dense class planes; unrolled class loop (C is small and static).
    planes = [logits_ref[c].astype(jnp.float32) for c in range(num_classes)]
    if need_row_mask:
        planes = [jnp.where(in_bounds, p, 0.0) for p in planes]   # keep exp() finite

    m = planes[0]
    for p in planes[1:]:
        m = jnp.maximum(m, p)
    exps = [jnp.exp(p - m) for p in planes]
    s = exps[0]
    for e in exps[1:]:
        s = s + e

    onehots = [(lab == c).astype(jnp.float32) for c in range(num_classes)]
    e_sel = onehots[0] * exps[0]       # exp of the label-class logit
    in_range = onehots[0]              # 1 if label in [0, C), else 0
    for oh, e in zip(onehots[1:], exps[1:]):
        e_sel = e_sel + oh * e
        in_range = in_range + oh

    # intersection per pixel = softmax prob of the label class (needs exact 1/s);
    # sum_pred per valid pixel == 1 exactly, so denom = valid * (in_range + 1).
    inv = pl.reciprocal(s, approx=False)
    inter_plane = e_sel * inv * valid_f                           # (S, 128)
    denom_plane = (in_range + 1.0) * valid_f                      # (S, 128)

    # Fold S rows into one (8,128) vreg: vreg-preserving reshape + elementwise adds.
    g = tile_rows // 8
    acc_ref[0] += inter_plane.reshape(g, 8, 128).sum(axis=0)
    acc_ref[1] += denom_plane.reshape(g, 8, 128).sum(axis=0)

    @pl.when(ti == pl.num_programs(2) - 1)
    def _():
        out_ref[...] = jnp.sum(acc_ref[...], axis=1)              # (2, 128)


def log_cosh_dice_loss(logits, labels, *, num_classes=NUM_CLASSES, smooth=SMOOTH,
                       ignore_index=IGNORE_INDEX, max_tile_rows=MAX_TILE_ROWS):
    """logits: (N, C, H, W) float (f32 or bf16); labels: (N, H, W) int (int32/uint8).

    Returns the scalar LogCoshDiceLoss.
    """
    N, C, H, W = logits.shape
    assert C == num_classes, "channel dim must equal num_classes"
    HW = H * W

    if labels.dtype.itemsize > 4:          # e.g. int64 with x64 enabled
        labels = labels.astype(jnp.int32)

    # Pure reshape to class-major flat pixels (no transpose).
    xf = logits.reshape(N, C, HW)
    labf = labels.reshape(N, HW)

    # Pad the pixel axis to a multiple of 8*128 so rows pack densely into vregs.
    # Typical segmentation shapes (HW % 1024 == 0) take the no-copy fast path.
    pad = (-HW) % 1024
    if pad:
        # TODO(synk): odd-shape fallback costs one extra HBM copy of logits/labels.
        xf = jnp.pad(xf, ((0, 0), (0, 0), (0, pad)))
        labf = jnp.pad(labf, ((0, 0), (0, pad)), constant_values=ignore_index)
    R = (HW + pad) // 128                   # sublane rows of 128 pixels, R % 8 == 0

    x4 = xf.reshape(N, C, R, 128)
    lab4 = labf.reshape(N, 1, R, 128)

    # Tile the row axis; S is a multiple of 8 (or the full row extent).
    S = R if R <= max_tile_rows else max_tile_rows
    num_tiles = pl.cdiv(R, S)
    # v7x: extra "parallel" grid axis so both TensorCores get work even when N is small.
    split = 2 if num_tiles >= 2 else 1
    tps = pl.cdiv(num_tiles, split)         # tiles per split
    need_row_mask = (split * tps * S) != R

    kernel = functools.partial(
        _dice_partial_kernel, num_classes=C, ignore_index=ignore_index,
        rows=R, tile_rows=S, tiles_per_split=tps, need_row_mask=need_row_mask)

    def in_map(sp, n, ti):
        # Clamp so over-split tiles re-read a valid block (their rows are masked out).
        return (n, 0, jnp.minimum(sp * tps + ti, num_tiles - 1), 0)

    partials = pl.pallas_call(
        kernel,
        out_shape=jax.ShapeDtypeStruct((split, N, 2, 128), jnp.float32),
        grid_spec=pltpu.PrefetchScalarGridSpec(
            num_scalar_prefetch=0,
            grid=(split, N, tps),
            in_specs=[
                pl.BlockSpec((None, C, S, 128), in_map),   # logits planes (C, S, 128)
                pl.BlockSpec((None, 1, S, 128), in_map),   # labels        (1, S, 128)
            ],
            out_specs=pl.BlockSpec((None, None, 2, 128),
                                   lambda sp, n, ti: (sp, n, 0, 0)),
            scratch_shapes=[pltpu.VMEM((2, 8, 128), jnp.float32)],
        ),
        compiler_params=pltpu.CompilerParams(
            dimension_semantics=("parallel", "parallel", "arbitrary"),
            vmem_limit_bytes=32 * 1024 * 1024),
    )(x4, lab4)

    # Tiny cross-lane reduction outside the kernel (split * N * 1 KiB).
    totals = jnp.sum(partials, axis=(0, 1, 3))               # (2,)
    inter, denom = totals[0], totals[1]
    score = (2.0 * inter + smooth) / (denom + smooth)
    dice = 1.0 - score
    # LogCosh wrapper: log((exp(x) + exp(-x)) / 2)
    return jnp.log((jnp.exp(dice) + jnp.exp(-dice)) / 2.0)


def _log_cosh_dice_loss_ref(logits, labels, *, num_classes=NUM_CLASSES,
                            smooth=SMOOTH, ignore_index=IGNORE_INDEX):
    """Pure-JAX reference matching the PyTorch LogCoshDiceLoss module."""
    pred = jax.nn.softmax(logits.astype(jnp.float32), axis=1)          # (N,C,H,W)
    onehot = jax.nn.one_hot(labels, num_classes, axis=1, dtype=jnp.float32)
    valid = (labels != ignore_index)[:, None, :, :].astype(jnp.float32)
    t = onehot * valid
    p = pred * valid
    inter = jnp.sum(t * p)
    score = (2.0 * inter + smooth) / (jnp.sum(t) + jnp.sum(p) + smooth)
    x = 1.0 - score
    return jnp.log((jnp.exp(x) + jnp.exp(-x)) / 2.0)


if __name__ == "__main__":
    key = jax.random.PRNGKey(0)
    k1, k2, k3 = jax.random.split(key, 3)

    # Fast path: HW is a multiple of 1024, no padding copy.
    N, C, H, W = 2, NUM_CLASSES, 32, 32
    logits = jax.random.normal(k1, (N, C, H, W), dtype=jnp.float32)
    labels = jax.random.randint(k2, (N, H, W), 0, NUM_CLASSES, dtype=jnp.int32)
    drop = jax.random.uniform(k3, (N, H, W)) < 0.1   # exercise the ignore_index mask
    labels = jnp.where(drop, IGNORE_INDEX, labels)

    loss = jax.block_until_ready(log_cosh_dice_loss(logits, labels))
    ref = jax.block_until_ready(_log_cosh_dice_loss_ref(logits, labels))
    assert jnp.allclose(loss, ref, rtol=1e-5, atol=1e-5), (loss, ref)

    # Odd spatial shape: exercises the padding fallback path.
    H2, W2 = 10, 13
    logits2 = jax.random.normal(k1, (N, C, H2, W2), dtype=jnp.float32)
    labels2 = jax.random.randint(k2, (N, H2, W2), 0, NUM_CLASSES, dtype=jnp.int32)
    loss2 = jax.block_until_ready(log_cosh_dice_loss(logits2, labels2))
    ref2 = jax.block_until_ready(_log_cosh_dice_loss_ref(logits2, labels2))
    assert jnp.allclose(loss2, ref2, rtol=1e-5, atol=1e-5), (loss2, ref2)

    print("KERNEL_OK")
</pallas_src>

<mosaic_0001>
module attributes {stable_mosaic.version = 11 : i64} {
  func.func @_dice_partial_kernel(%arg0: i32, %arg1: i32, %arg2: i32, %arg3: memref<1x4x8x128xf32, #tpu.memory_space<vmem>>, %arg4: memref<1x1x8x128xi32, #tpu.memory_space<vmem>>, %arg5: memref<1x1x2x128xf32, #tpu.memory_space<vmem>>, %arg6: memref<2x8x128xf32, #tpu.memory_space<vmem>>) attributes {dimension_semantics = [#tpu.dimension_semantics<parallel>, #tpu.dimension_semantics<parallel>, #tpu.dimension_semantics<arbitrary>], iteration_bounds = array<i64: 1, 2, 1>, scalar_prefetch = 0 : i64, scratch_operands = 1 : i64, tpu.core_type = #tpu.core_type<tc>, window_params = [{transform_indices = @transform_0, window_bounds = array<i64: 1, 4, 8, 128>}, {transform_indices = @transform_1, window_bounds = array<i64: 1, 1, 8, 128>}, {transform_indices = @transform_2, window_bounds = array<i64: 1, 1, 2, 128>}]} {
    %c0_i32 = arith.constant 0 : i32
    %0 = arith.cmpi eq, %arg2, %c0_i32 : i32
    %1 = arith.extui %0 : i1 to i32
    %c0_i32_0 = arith.constant 0 : i32
    %2 = arith.cmpi ne, %1, %c0_i32_0 : i32
    scf.if %2 {
      %cst_34 = arith.constant 0.000000e+00 : f32
      %82 = vector.broadcast %cst_34 : f32 to vector<2x8x128xf32>
      %c0_35 = arith.constant 0 : index
      %c0_36 = arith.constant 0 : index
      %c0_37 = arith.constant 0 : index
      %83 = vector.load %arg6[%c0_35, %c0_36, %c0_37] : memref<2x8x128xf32, #tpu.memory_space<vmem>>, vector<2x8x128xf32>
      tpu.vector_store %arg6[%c0_35, %c0_36, %c0_37], %82 {strides = array<i32>} : memref<2x8x128xf32, #tpu.memory_space<vmem>>, vector<2x8x128xf32>,
    } else {
    }
    %c0 = arith.constant 0 : index
    %c0_1 = arith.constant 0 : index
    %c0_2 = arith.constant 0 : index
    %c0_3 = arith.constant 0 : index
    %3 = vector.load %arg4[%c0, %c0_1, %c0_2, %c0_3] : memref<1x1x8x128xi32, #tpu.memory_space<vmem>>, vector<1x1x8x128xi32>
    %4 = vector.shape_cast %3 : vector<1x1x8x128xi32> to vector<8x128xi32>
    %c255_i32 = arith.constant 255 : i32
    %5 = vector.broadcast %c255_i32 : i32 to vector<8x128xi32>
    %6 = arith.cmpi ne, %4, %5 : vector<8x128xi32>
    %7 = arith.extui %6 : vector<8x128xi1> to vector<8x128xi32>
    %8 = arith.sitofp %7 : vector<8x128xi32> to vector<8x128xf32>
    %c0_4 = arith.constant 0 : index
    %c0_5 = arith.constant 0 : index
    %c0_6 = arith.constant 0 : index
    %c0_7 = arith.constant 0 : index
    %9 = vector.load %arg3[%c0_4, %c0_5, %c0_6, %c0_7] : memref<1x4x8x128xf32, #tpu.memory_space<vmem>>, vector<1x1x8x128xf32>
    %10 = vector.shape_cast %9 : vector<1x1x8x128xf32> to vector<8x128xf32>
    %c0_8 = arith.constant 0 : index
    %c1 = arith.constant 1 : index
    %c0_9 = arith.constant 0 : index
    %c0_10 = arith.constant 0 : index
    %11 = vector.load %arg3[%c0_8, %c1, %c0_9, %c0_10] : memref<1x4x8x128xf32, #tpu.memory_space<vmem>>, vector<1x1x8x128xf32>
    %12 = vector.shape_cast %11 : vector<1x1x8x128xf32> to vector<8x128xf32>
    %c0_11 = arith.constant 0 : index
    %c2 = arith.constant 2 : index
    %c0_12 = arith.constant 0 : index
    %c0_13 = arith.constant 0 : index
    %13 = vector.load %arg3[%c0_11, %c2, %c0_12, %c0_13] : memref<1x4x8x128xf32, #tpu.memory_space<vmem>>, vector<1x1x8x128xf32>
    %14 = vector.shape_cast %13 : vector<1x1x8x128xf32> to vector<8x128xf32>
    %c0_14 = arith.constant 0 : index
    %c3 = arith.constant 3 : index
    %c0_15 = arith.constant 0 : index
    %c0_16 = arith.constant 0 : index
    %15 = vector.load %arg3[%c0_14, %c3, %c0_15, %c0_16] : memref<1x4x8x128xf32, #tpu.memory_space<vmem>>, vector<1x1x8x128xf32>
    %16 = vector.shape_cast %15 : vector<1x1x8x128xf32> to vector<8x128xf32>
    %17 = arith.maximumf %10, %12 : vector<8x128xf32>
    %18 = arith.maximumf %17, %14 : vector<8x128xf32>
    %19 = arith.maximumf %18, %16 : vector<8x128xf32>
    %20 = arith.subf %10, %19 : vector<8x128xf32>
    %21 = math.exp %20 : vector<8x128xf32>
    %22 = arith.subf %12, %19 : vector<8x128xf32>
    %23 = math.exp %22 : vector<8x128xf32>
    %24 = arith.subf %14, %19 : vector<8x128xf32>
    %25 = math.exp %24 : vector<8x128xf32>
    %26 = arith.subf %16, %19 : vector<8x128xf32>
    %27 = math.exp %26 : vector<8x128xf32>
    %28 = arith.addf %21, %23 : vector<8x128xf32>
    %29 = arith.addf %28, %25 : vector<8x128xf32>
    %30 = arith.addf %29, %27 : vector<8x128xf32>
    %c0_i32_17 = arith.constant 0 : i32
    %31 = vector.broadcast %c0_i32_17 : i32 to vector<8x128xi32>
    %32 = arith.cmpi eq, %4, %31 : vector<8x128xi32>
    %33 = arith.extui %32 : vector<8x128xi1> to vector<8x128xi32>
    %34 = arith.sitofp %33 : vector<8x128xi32> to vector<8x128xf32>
    %c1_i32 = arith.constant 1 : i32
    %35 = vector.broadcast %c1_i32 : i32 to vector<8x128xi32>
    %36 = arith.cmpi eq, %4, %35 : vector<8x128xi32>
    %37 = arith.extui %36 : vector<8x128xi1> to vector<8x128xi32>
    %38 = arith.sitofp %37 : vector<8x128xi32> to vector<8x128xf32>
    %c2_i32 = arith.constant 2 : i32
    %39 = vector.broadcast %c2_i32 : i32 to vector<8x128xi32>
    %40 = arith.cmpi eq, %4, %39 : vector<8x128xi32>
    %41 = arith.extui %40 : vector<8x128xi1> to vector<8x128xi32>
    %42 = arith.sitofp %41 : vector<8x128xi32> to vector<8x128xf32>
    %c3_i32 = arith.constant 3 : i32
    %43 = vector.broadcast %c3_i32 : i32 to vector<8x128xi32>
    %44 = arith.cmpi eq, %4, %43 : vector<8x128xi32>
    %45 = arith.extui %44 : vector<8x128xi1> to vector<8x128xi32>
    %46 = arith.sitofp %45 : vector<8x128xi32> to vector<8x128xf32>
    %47 = arith.mulf %34, %21 : vector<8x128xf32>
    %48 = arith.mulf %38, %23 : vector<8x128xf32>
    %49 = arith.addf %47, %48 : vector<8x128xf32>
    %50 = arith.addf %34, %38 : vector<8x128xf32>
    %51 = arith.mulf %42, %25 : vector<8x128xf32>
    %52 = arith.addf %49, %51 : vector<8x128xf32>
    %53 = arith.addf %50, %42 : vector<8x128xf32>
    %54 = arith.mulf %46, %27 : vector<8x128xf32>
    %55 = arith.addf %52, %54 : vector<8x128xf32>
    %56 = arith.addf %53, %46 : vector<8x128xf32>
    %57 = tpu.reciprocal %30 : vector<8x128xf32> -> vector<8x128xf32>
    %58 = arith.mulf %55, %57 : vector<8x128xf32>
    %59 = arith.mulf %58, %8 : vector<8x128xf32>
    %cst = arith.constant 1.000000e+00 : f32
    %60 = vector.broadcast %cst : f32 to vector<8x128xf32>
    %61 = arith.addf %56, %60 : vector<8x128xf32>
    %62 = arith.mulf %61, %8 : vector<8x128xf32>
    %c0_18 = arith.constant 0 : index
    %c0_19 = arith.constant 0 : index
    %c0_20 = arith.constant 0 : index
    %63 = vector.load %arg6[%c0_18, %c0_19, %c0_20] : memref<2x8x128xf32, #tpu.memory_space<vmem>>, vector<1x8x128xf32>
    %64 = vector.shape_cast %63 : vector<1x8x128xf32> to vector<8x128xf32>
    %65 = vector.shape_cast %59 : vector<8x128xf32> to vector<1x8x128xf32>
    %cst_21 = arith.constant dense<0.000000e+00> : vector<8x128xf32>
    %66 = vector.multi_reduction <add>, %65, %cst_21 [0] : vector<1x8x128xf32> to vector<8x128xf32>
    %67 = arith.addf %64, %66 : vector<8x128xf32>
    %c0_22 = arith.constant 0 : index
    %c0_23 = arith.constant 0 : index
    %c0_24 = arith.constant 0 : index
    %68 = vector.load %arg6[%c0_22, %c0_23, %c0_24] : memref<2x8x128xf32, #tpu.memory_space<vmem>>, vector<1x8x128xf32>
    %69 = vector.shape_cast %68 : vector<1x8x128xf32> to vector<8x128xf32>
    %70 = vector.shape_cast %67 : vector<8x128xf32> to vector<1x8x128xf32>
    tpu.vector_store %arg6[%c0_22, %c0_23, %c0_24], %70 {strides = array<i32>} : memref<2x8x128xf32, #tpu.memory_space<vmem>>, vector<1x8x128xf32>,
    %c1_25 = arith.constant 1 : index
    %c0_26 = arith.constant 0 : index
    %c0_27 = arith.constant 0 : index
    %71 = vector.load %arg6[%c1_25, %c0_26, %c0_27] : memref<2x8x128xf32, #tpu.memory_space<vmem>>, vector<1x8x128xf32>
    %72 = vector.shape_cast %71 : vector<1x8x128xf32> to vector<8x128xf32>
    %73 = vector.shape_cast %62 : vector<8x128xf32> to vector<1x8x128xf32>
    %cst_28 = arith.constant dense<0.000000e+00> : vector<8x128xf32>
    %74 = vector.multi_reduction <add>, %73, %cst_28 [0] : vector<1x8x128xf32> to vector<8x128xf32>
    %75 = arith.addf %72, %74 : vector<8x128xf32>
    %c1_29 = arith.constant 1 : index
    %c0_30 = arith.constant 0 : index
    %c0_31 = arith.constant 0 : index
    %76 = vector.load %arg6[%c1_29, %c0_30, %c0_31] : memref<2x8x128xf32, #tpu.memory_space<vmem>>, vector<1x8x128xf32>
    %77 = vector.shape_cast %76 : vector<1x8x128xf32> to vector<8x128xf32>
    %78 = vector.shape_cast %75 : vector<8x128xf32> to vector<1x8x128xf32>
    tpu.vector_store %arg6[%c1_29, %c0_30, %c0_31], %78 {strides = array<i32>} : memref<2x8x128xf32, #tpu.memory_space<vmem>>, vector<1x8x128xf32>,
    %c0_i32_32 = arith.constant 0 : i32
    %79 = arith.cmpi eq, %arg2, %c0_i32_32 : i32
    %80 = arith.extui %79 : i1 to i32
    %c0_i32_33 = arith.constant 0 : i32
    %81 = arith.cmpi ne, %80, %c0_i32_33 : i32
    scf.if %81 {
      %c0_34 = arith.constant 0 : index
      %c0_35 = arith.constant 0 : index
      %c0_36 = arith.constant 0 : index
      %82 = vector.load %arg6[%c0_34, %c0_35, %c0_36] : memref<2x8x128xf32, #tpu.memory_space<vmem>>, vector<2x8x128xf32>
      %cst_37 = arith.constant dense<0.000000e+00> : vector<2x128xf32>
      %83 = vector.multi_reduction <add>, %82, %cst_37 [1] : vector<2x8x128xf32> to vector<2x128xf32>
      %c0_38 = arith.constant 0 : index
      %c0_39 = arith.constant 0 : index
      %c0_40 = arith.constant 0 : index
      %c0_41 = arith.constant 0 : index
      %84 = vector.load %arg5[%c0_38, %c0_39, %c0_40, %c0_41] : memref<1x1x2x128xf32, #tpu.memory_space<vmem>>, vector<1x1x2x128xf32>
      %85 = vector.shape_cast %84 : vector<1x1x2x128xf32> to vector<2x128xf32>
      %86 = vector.shape_cast %83 : vector<2x128xf32> to vector<1x1x2x128xf32>
      tpu.vector_store %arg5[%c0_38, %c0_39, %c0_40, %c0_41], %86 {strides = array<i32>} : memref<1x1x2x128xf32, #tpu.memory_space<vmem>>, vector<1x1x2x128xf32>,
    } else {
    }
    return
  }
  func.func @transform_0(%arg0: i32, %arg1: i32, %arg2: i32) -> (i32, i32, i32, i32) {
    %c1_i32 = arith.constant 1 : i32
    %0 = arith.muli %arg0, %c1_i32 : i32
    %1 = arith.addi %0, %arg2 : i32
    %c0_i32 = arith.constant 0 : i32
    %2 = arith.minsi %1, %c0_i32 : i32
    %c0_i32_0 = arith.constant 0 : i32
    %c0_i32_1 = arith.constant 0 : i32
    %c0_i32_2 = arith.constant 0 : i32
    return %arg1, %c0_i32_0, %2, %c0_i32_1 : i32, i32, i32, i32
  }
  func.func @transform_1(%arg0: i32, %arg1: i32, %arg2: i32) -> (i32, i32, i32, i32) {
    %c1_i32 = arith.constant 1 : i32
    %0 = arith.muli %arg0, %c1_i32 : i32
    %1 = arith.addi %0, %arg2 : i32
    %c0_i32 = arith.constant 0 : i32
    %2 = arith.minsi %1, %c0_i32 : i32
    %c0_i32_0 = arith.constant 0 : i32
    %c0_i32_1 = arith.constant 0 : i32
    %c0_i32_2 = arith.constant 0 : i32
    return %arg1, %c0_i32_0, %2, %c0_i32_1 : i32, i32, i32, i32
  }
  func.func @transform_2(%arg0: i32, %arg1: i32, %arg2: i32) -> (i32, i32, i32, i32) {
    %c0_i32 = arith.constant 0 : i32
    %c0_i32_0 = arith.constant 0 : i32
    %c0_i32_1 = arith.constant 0 : i32
    return %arg0, %arg1, %c0_i32, %c0_i32_0 : i32, i32, i32, i32
  }
}

</mosaic_0001>

<llo_original>
// kernel: tpu_custom_call.1
$region0: #{tpu_custom_call.1}
  #allocation0 [shape = 'u32[]', space=smem, size = 0x4, offset = 0x4, fixed_abs, tag = 'smem constant byte address 0x4 - core index']
  #allocation1 [shape = 'u32[144,128]{1,0:T(1,128)}', space=vmem, size = 0x12000, scoped, tag = 'internal scratch']
  #allocation2 [shape = 'f32[2,8,128]{2,1,0:T(8,128)}', space=vmem, size = 0x2000, scoped, tag = 'scratch operand']
  %s0 = inlined_call_operand.hbm [shape: f32[2,4,8,128], index: 0, kind: input, shape index: {}]
  %s1 = inlined_call_operand.hbm [shape: s32[2,1,8,128], index: 1, kind: input, shape index: {}]
  %s2 = inlined_call_operand.hbm [shape: f32[1,2,2,128], index: 2, kind: output, shape index: {}]
  %s3 = sld [smem:[#allocation0]]
  $region57: #{tpu_custom_call.1} parent=0
    _
  %s5 = ssub.s32 1, %s3
  %s6 = scalar_select 0, %s5, %s3
  $region1: #{tpu_custom_call.1} parent=0
    #allocation3 [shape = 'u8[32768]{0}', space=vmem, size = 0x8000, scoped, tag = 'input window, operand 0']
    #allocation4 [shape = 's32[2]{0}', space=sflag, size = 0x8, scoped, tag = 'scoped memory for tpu_custom_call.1']
    #allocation5 [shape = 's32[2]{0}', space=sflag, size = 0x8, scoped, tag = 'scoped memory for tpu_custom_call.1']
    #allocation6 [shape = 'u8[8192]{0}', space=vmem, size = 0x2000, scoped, tag = 'input window, operand 1']
    #allocation7 [shape = 's32[2]{0}', space=sflag, size = 0x8, scoped, tag = 'scoped memory for tpu_custom_call.1']
    #allocation8 [shape = 'u8[2048]{0}', space=vmem, size = 0x800, scoped, tag = 'output window, operand 0']
    %7 = vsyncpa [#allocation4], 0
    %s8 = scalar_lea.sflag [#allocation4], 1
    %9 = vsyncpa %s8, 0
    %10 = vsyncpa [#allocation7], 0
    %s11 = scalar_lea.sflag [#allocation7], 1
    %12 = vsyncpa %s11, 0
    %13 = vsyncpa [#allocation5], 0
    %s14 = scalar_lea.sflag [#allocation5], 1
    %15 = vsyncpa %s14, 0
    loop: start=0, step=1, limit=4
    $region2: #{tpu_custom_call.1} parent=1 // loop_pre_header
      _
    $region3: #{tpu_custom_call.1} parent=1 // loop_header
      %s17 = sphi 0, %s21
      %p18 = scmp.ge.s32.totalorder %s17, 4
      %s24 = sphi 0, %s43
      %s25 = sphi 0, %s39
      %s26 = sphi 0, %s35
      %s27 = sphi 0, %s24
      %s28 = sphi 0, %s25
      %s29 = sphi 0, %s26
      %s30 = sphi 0, %s27
      %s31 = sphi 0, %s28
      %s32 = sphi 0, %s29
      %s54 = sphi 0, %s56
      %s57 = sphi 0, %s54
      %s58 = sphi 0, %s57
      %s74 = sphi 0, %s58
      %s88 = sphi 0, %s90
      %s91 = sphi 0, %s88
      %s92 = sphi 0, %s91
      %s108 = sphi 0, %s92
      %s116 = sphi 0, %s118
      %s119 = sphi 0, %s116
      %s120 = sphi 0, %s119
      %s136 = sphi 0, %s120
    $region4: #{tpu_custom_call.1} parent=1 // loop_header_branch
      %20 = sbr.rel (%p18) target = $region8
    $region5: #{tpu_custom_call.1} parent=1 // loop_body
      %s22 = ssub.s32 %s17, 1
      %s23 = ssub.s32 %s17, 2
      %s33 = sadd.s32 1, %s26
      %p34 = scmp.ge.s32.totalorder %s33, 1
      %s35 = scalar_select %p34, 0, %s33
      %s36 = sadd.s32 1, %s25
      %s37 = scalar_select %p34, %s36, %s25
      %p38 = scmp.ge.s32.totalorder %s37, 2
      %s39 = scalar_select %p38, 0, %s37
      %s40 = sadd.s32 1, %s24
      %s41 = scalar_select %p38, %s40, %s24
      %p42 = scmp.ge.s32.totalorder %s41, 1
      %s43 = scalar_select %p42, 0, %s41
      %s44 = sadd.s32 %s24, %s26
      %p45 = scmp.lt.s32.totalorder %s44, 0
      %s46 = scalar_select %p45, %s44, 0
      %s47 = sadd.s32 %s43, %s35
      %p48 = scmp.lt.s32.totalorder %s47, 0
      %s49 = scalar_select %p48, %s47, 0
      %s50 = ssub.s32 %s25, %s39
      %s51 = ssub.s32 %s46, %s49
      %s52 = sor.u32 %s50, %s51
      %p53 = scmp.eq.s32.totalorder %s52, 0
      %s55 = sadd.s32 %s54, 1
      %s56 = scalar_select %p53, %s54, %s55
      %p59 = pneg %p53
      %p60 = scmp.eq.s32.totalorder %s17, 1
      %p61 = por %p59, %p60
      %p62 = scmp.ne.s32.totalorder %s54, %s57
      %p63 = scmp.eq.s32.totalorder %s17, 0
      %p64 = por %p62, %p63
      %p65 = scmp.ne.s32.totalorder %s54, %s57
      %p66 = scmp.eq.s32.totalorder %s22, 1
      %p67 = por %p65, %p66
      %p68 = scmp.ne.s32.totalorder %s57, %s58
      %p69 = scmp.eq.s32.totalorder %s22, 0
      %p70 = por %p68, %p69
      %p71 = scmp.ne.s32.totalorder %s57, %s58
      %p72 = scmp.eq.s32.totalorder %s23, 1
      %p73 = por %p71, %p72
      %p75 = scmp.ne.s32.totalorder %s58, %s74
      %p76 = scmp.eq.s32.totalorder %s23, 0
      %p77 = por %p75, %p76
      %s78 = sadd.s32 %s24, %s26
      %p79 = scmp.lt.s32.totalorder %s78, 0
      %s80 = scalar_select %p79, %s78, 0
      %s81 = sadd.s32 %s43, %s35
      %p82 = scmp.lt.s32.totalorder %s81, 0
      %s83 = scalar_select %p82, %s81, 0
      %s84 = ssub.s32 %s25, %s39
      %s85 = ssub.s32 %s80, %s83
      %s86 = sor.u32 %s84, %s85
      %p87 = scmp.eq.s32.totalorder %s86, 0
      %s89 = sadd.s32 %s88, 1
      %s90 = scalar_select %p87, %s88, %s89
      %p93 = pneg %p87
      %p94 = scmp.eq.s32.totalorder %s17, 1
      %p95 = por %p93, %p94
      %p96 = scmp.ne.s32.totalorder %s88, %s91
      %p97 = scmp.eq.s32.totalorder %s17, 0
      %p98 = por %p96, %p97
      %p99 = scmp.ne.s32.totalorder %s88, %s91
      %p100 = scmp.eq.s32.totalorder %s22, 1
      %p101 = por %p99, %p100
      %p102 = scmp.ne.s32.totalorder %s91, %s92
      %p103 = scmp.eq.s32.totalorder %s22, 0
      %p104 = por %p102, %p103
      %p105 = scmp.ne.s32.totalorder %s91, %s92
      %p106 = scmp.eq.s32.totalorder %s23, 1
      %p107 = por %p105, %p106
      %p109 = scmp.ne.s32.totalorder %s92, %s108
      %p110 = scmp.eq.s32.totalorder %s23, 0
      %p111 = por %p109, %p110
      %s112 = ssub.s32 %s24, %s43
      %s113 = ssub.s32 %s25, %s39
      %s114 = sor.u32 %s112, %s113
      %p115 = scmp.eq.s32.totalorder %s114, 0
      %s117 = sadd.s32 %s116, 1
      %s118 = scalar_select %p115, %s116, %s117
      %p121 = pneg %p115
      %p122 = scmp.eq.s32.totalorder %s17, 1
      %p123 = por %p121, %p122
      %p124 = scmp.ne.s32.totalorder %s116, %s119
      %p125 = scmp.eq.s32.totalorder %s17, 0
      %p126 = por %p124, %p125
      %p127 = scmp.ne.s32.totalorder %s116, %s119
      %p128 = scmp.eq.s32.totalorder %s22, 1
      %p129 = por %p127, %p128
      %p130 = scmp.ne.s32.totalorder %s119, %s120
      %p131 = scmp.eq.s32.totalorder %s22, 0
      %p132 = por %p130, %p131
      %p133 = scmp.ne.s32.totalorder %s119, %s120
      %p134 = scmp.eq.s32.totalorder %s23, 1
      %p135 = por %p133, %p134
      %p137 = scmp.ne.s32.totalorder %s120, %s136
      %p138 = scmp.eq.s32.totalorder %s23, 0
      %p139 = por %p137, %p138
      %p140 = scmp.le.s32.totalorder 1, %s17
      %p141 = scmp.lt.s32.totalorder %s17, 3
      %p142 = pnand %p140, %p141
      %p143 = pneg %p142
      // Predicated region
      $region9: #{tpu_custom_call.1} parent=5 // pred_check
        _
      $region10: #{tpu_custom_call.1} parent=5 // pred_check_branch
        %145 = sbr.rel (%p142) target = $region12
      $region11: #{tpu_custom_call.1} parent=5 // pred_region
        %s146 = ssub.s32 %s17, 1
      $region12: #{tpu_custom_call.1} parent=5 // pred_fallthru
        _
      %p147 = scmp.lt.s32.totalorder %s17, 2
      // Predicated region
      $region13: #{tpu_custom_call.1} parent=5 // pred_check
        %p148 = pneg %p147
      $region14: #{tpu_custom_call.1} parent=5 // pred_check_branch
        %150 = sbr.rel (%p148) target = $region16
      $region15: #{tpu_custom_call.1} parent=5 // pred_region
        // Predicated region
        $region17: #{tpu_custom_call.1} parent=15 // pred_check
          %p151 = pneg %p64
        $region18: #{tpu_custom_call.1} parent=15 // pred_check_branch
          %153 = sbr.rel (%p151) target = $region20
        $region19: #{tpu_custom_call.1} parent=15 // pred_region
          %s154 = sand.u32 %s54, 1
          %s155 = scalar_lea.sflag [#allocation4], %s154
          %s156 = sand.u32 %s54, 1
          %s157 = smul.addr %s156, 32
          %s158 = scalar_lea.vmem [#allocation3], %s157
          %s159 = sadd.s32 %s24, %s26
          %p160 = scmp.lt.s32.totalorder %s159, 0
          %s161 = scalar_select %p160, %s159, 0
          %s163 = ssub.s32 512, 512
          %164 = vsyncadd %s155, %s163
          %s165 = smul.addr %s25, 4
          %s166 = sadd.s32 %s161, %s165
          %s167 = smul.addr %s166, 128
          %s168 = scalar_lea.hbm %s0, %s167
          %s169 = sshll.u32 %s158, 4
          %s170 = int_to_ptr.vmem [resolvable:$true] %s169
          %175 = dma.hbm_to_vmem [thread:$0]  %s168, 512, %s170, %s155, 128, 128, 8
        $region20: #{tpu_custom_call.1} parent=15 // pred_fallthru
          _
        // Predicated region
        $region21: #{tpu_custom_call.1} parent=15 // pred_check
          %p176 = pneg %p98
        $region22: #{tpu_custom_call.1} parent=15 // pred_check_branch
          %178 = sbr.rel (%p176) target = $region24
        $region23: #{tpu_custom_call.1} parent=15 // pred_region
          %s179 = sand.u32 %s88, 1
          %s180 = scalar_lea.sflag [#allocation7], %s179
          %s181 = sand.u32 %s88, 1
          %s182 = smul.addr %s181, 8
          %s183 = scalar_lea.vmem [#allocation6], %s182
          %s184 = sadd.s32 %s24, %s26
          %p185 = scmp.lt.s32.totalorder %s184, 0
          %s186 = scalar_select %p185, %s184, 0
          %s188 = ssub.s32 128, 128
          %189 = vsyncadd %s180, %s188
          %s190 = sadd.s32 %s186, %s25
          %s191 = smul.addr %s190, 128
          %s192 = scalar_lea.hbm %s1, %s191
          %s194 = sshll.u32 %s183, 4
          %s195 = int_to_ptr.vmem [resolvable:$true] %s194
          %197 = dma.hbm_to_vmem [thread:$0]  %s192, 128, %s195, %s180
        $region24: #{tpu_custom_call.1} parent=15 // pred_fallthru
          _
      $region16: #{tpu_custom_call.1} parent=5 // pred_fallthru
        _
      %p198 = scmp.le.s32.totalorder 1, %s17
      %p199 = scmp.lt.s32.totalorder %s17, 3
      %p200 = pnand %p198, %p199
      %p201 = pneg %p200
      // Predicated region
      $region25: #{tpu_custom_call.1} parent=5 // pred_check
        _
      $region26: #{tpu_custom_call.1} parent=5 // pred_check_branch
        %203 = sbr.rel (%p200) target = $region28
      $region27: #{tpu_custom_call.1} parent=5 // pred_region
        %s204 = ssub.s32 %s17, 1
        %s205 = sand.u32 %s57, 1
        %s206 = scalar_lea.sflag [#allocation4], %s205
        %s207 = sand.u32 %s57, 1
        %s208 = smul.addr %s207, 32
        %s209 = scalar_lea.vmem [#allocation3], %s208
        // Predicated region
        $region29: #{tpu_custom_call.1} parent=27 // pred_check
          %p210 = pneg %p70
        $region30: #{tpu_custom_call.1} parent=27 // pred_check_branch
          %212 = sbr.rel (%p210) target = $region32
        $region31: #{tpu_custom_call.1} parent=27 // pred_region
          %213 = dma.done %s206, 512
        $region32: #{tpu_custom_call.1} parent=27 // pred_fallthru
          _
        %s214 = sand.u32 %s91, 1
        %s215 = scalar_lea.sflag [#allocation7], %s214
        %s216 = sand.u32 %s91, 1
        %s217 = smul.addr %s216, 8
        %s218 = scalar_lea.vmem [#allocation6], %s217
        // Predicated region
        $region33: #{tpu_custom_call.1} parent=27 // pred_check
          %p219 = pneg %p104
        $region34: #{tpu_custom_call.1} parent=27 // pred_check_branch
          %221 = sbr.rel (%p219) target = $region36
        $region35: #{tpu_custom_call.1} parent=27 // pred_region
          %222 = dma.done %s215, 128
        $region36: #{tpu_custom_call.1} parent=27 // pred_fallthru
          _
        %s223 = sand.u32 %s57, 1
        %s224 = scalar_lea.sflag [#allocation4], %s223
        %s225 = sand.u32 %s57, 1
        %s226 = smul.addr %s225, 32
        %s227 = scalar_lea.vmem [#allocation3], %s226
        %p228 = pneg %p70
        %p229 = pneg %p67
        %s230 = sand.u32 %s91, 1
        %s231 = scalar_lea.sflag [#allocation7], %s230
        %s232 = sand.u32 %s91, 1
        %s233 = smul.addr %s232, 8
        %s234 = scalar_lea.vmem [#allocation6], %s233
        %p235 = pneg %p104
        %p236 = pneg %p101
        %p237 = pneg %p132
        %p238 = pneg %p129
        %s239 = sand.u32 %s119, 1
        %s240 = scalar_lea.sflag [#allocation5], %s239
        %s241 = sand.u32 %s119, 1
        %s242 = smul.addr %s241, 2
        %s243 = scalar_lea.vmem [#allocation8], %s242
        %s244 = sadd.s32 %s27, %s29
        %p245 = scmp.lt.s32.totalorder %s244, 0
        %s246 = scalar_select %p245, %s244, 0
        %s247 = sadd.s32 %s27, %s29
        %p248 = scmp.lt.s32.totalorder %s247, 0
        %s249 = scalar_select %p248, %s247, 0
        %p250 = scmp.eq.s32.totalorder %s29, 0
        // Predicated region
        $region37: #{tpu_custom_call.1} parent=27 // pred_check
          %p251 = pneg %p250
        $region38: #{tpu_custom_call.1} parent=27 // pred_check_branch
          %253 = sbr.rel (%p251) target = $region40
        $region39: #{tpu_custom_call.1} parent=27 // pred_region
          %254 = vst [vmem:[#allocation2] sm:$0xff] 0.0
          %255 = vst [vmem:[#allocation2 + $0x8] sm:$0xff] 0.0
        $region40: #{tpu_custom_call.1} parent=27 // pred_fallthru
          _
        %v256 = vld [vmem:[%s218] sm:$0xff]
        %vm257 = vcmp.ne.s32.totalorder %v256, 255
        %v258 = vsel %vm257, 1, 0
        %v259 = vcvt.s32.f32 %v258
        %v260 = vld [vmem:[%s209] sm:$0xff]
        %s261 = scalar_lea.vmem %s209, 8 [#allocation3]
        %v262 = vld [vmem:[%s261] sm:$0xff]
        %s263 = scalar_lea.vmem %s209, 16 [#allocation3]
        %v264 = vld [vmem:[%s263] sm:$0xff]
        %s265 = scalar_lea.vmem %s209, 24 [#allocation3]
        %v266 = vld [vmem:[%s265] sm:$0xff]
        %v267 = vmax.f32 %v260, %v262
        %v268 = vmax.f32 %v267, %v264
        %v269 = vmax.f32 %v268, %v266
        %v270 = vsub.f32 %v260, %v269
        %v271 = vmul.f32 %v270, 1.442695
        %v272 = vpow.pop %v271
        %v273 = vsub.f32 %v262, %v269
        %v274 = vmul.f32 %v273, 1.442695
        %v275 = vpow.pop %v274
        %v276 = vsub.f32 %v264, %v269
        %v277 = vmul.f32 %v276, 1.442695
        %v278 = vpow.pop %v277
        %v279 = vsub.f32 %v266, %v269
        %v280 = vmul.f32 %v279, 1.442695
        %v281 = vpow.pop %v280
        %v282 = vadd.f32 %v272, %v275
        %v283 = vadd.f32 %v282, %v278
        %v284 = vadd.f32 %v283, %v281
        %vm285 = vcmp.eq.s32.totalorder %v256, 0
        %v286 = vsel %vm285, 1, 0
        %v287 = vcvt.s32.f32 %v286
        %vm288 = vcmp.eq.s32.totalorder %v256, 1
        %v289 = vsel %vm288, 1, 0
        %v290 = vcvt.s32.f32 %v289
        %vm291 = vcmp.eq.s32.totalorder %v256, 2
        %v292 = vsel %vm291, 1, 0
        %v293 = vcvt.s32.f32 %v292
        %vm294 = vcmp.eq.s32.totalorder %v256, 3
        %v295 = vsel %vm294, 1, 0
        %v296 = vcvt.s32.f32 %v295
        %v297 = vmul.f32 %v287, %v272
        %v298 = vmul.f32 %v290, %v275
        %v299 = vadd.f32 %v297, %v298
        %v300 = vadd.f32 %v287, %v290
        %v301 = vmul.f32 %v293, %v278
        %v302 = vadd.f32 %v299, %v301
        %v303 = vadd.f32 %v300, %v293
        %v304 = vmul.f32 %v296, %v281
        %v305 = vadd.f32 %v302, %v304
        %v306 = vadd.f32 %v303, %v296
        %v307 = vrcp.pop %v284
        %v308 = vmul.f32 %v305, %v307
        %v309 = vmul.f32 %v308, %v259
        %v310 = vadd.f32 %v306, 1.0
        %v311 = vmul.f32 %v310, %v259
        %v312 = vld [vmem:[#allocation2] sm:$0xff]
        %v313 = vadd.f32 %v309, 0.0
        %v314 = vadd.f32 %v312, %v313
        %315 = vst [vmem:[#allocation2] sm:$0xff] %v314
        %s316 = scalar_lea.vmem [#allocation2], 8
        %v317 = vld [vmem:[%s316] sm:$0xff]
        %v318 = vadd.f32 %v311, 0.0
        %v319 = vadd.f32 %v317, %v318
        %320 = vst [vmem:[%s316] sm:$0xff] %v319
        // Predicated region
        $region41: #{tpu_custom_call.1} parent=27 // pred_check
          %p321 = pneg %p250
        $region42: #{tpu_custom_call.1} parent=27 // pred_check_branch
          %323 = sbr.rel (%p321) target = $region44
        $region43: #{tpu_custom_call.1} parent=27 // pred_region
          %v324 = vld [vmem:[#allocation2] sm:$0xff]
          %v325 = vld [vmem:[#allocation2 + $0x8] sm:$0xff]
          %v326 = vrot.slane %v324, 4
          %v327 = vadd.f32 %v324, %v326
          %v328 = vrot.slane %v327, 2
          %v329 = vadd.f32 %v327, %v328
          %v330 = vrot.slane %v329, 1
          %v331 = vadd.f32 %v329, %v330
          %v332 = vrot.slane %v325, 4
          %v333 = vadd.f32 %v325, %v332
          %v334 = vrot.slane %v333, 2
          %v335 = vadd.f32 %v333, %v334
          %v336 = vrot.slane %v335, 1
          %v337 = vadd.f32 %v335, %v336
          %vm340 = vcmask 1041409
          %v341 = vsel %vm340, %v337, %v331
          %343 = vst [vmem:[%s243] sm:$0x3] %v341
        $region44: #{tpu_custom_call.1} parent=27 // pred_fallthru
          _
        %s344 = sand.u32 %s119, 1
        %s345 = scalar_lea.sflag [#allocation5], %s344
        %s346 = sand.u32 %s119, 1
        %s347 = smul.addr %s346, 2
        %s348 = scalar_lea.vmem [#allocation8], %s347
        // Predicated region
        $region45: #{tpu_custom_call.1} parent=27 // pred_check
          %p349 = pneg %p129
        $region46: #{tpu_custom_call.1} parent=27 // pred_check_branch
          %351 = sbr.rel (%p349) target = $region48
        $region47: #{tpu_custom_call.1} parent=27 // pred_region
          %s353 = ssub.s32 32, 32
          %354 = vsyncadd %s345, %s353
          %s355 = smul.addr %s27, 2
          %s356 = sadd.s32 %s28, %s355
          %s357 = smul.addr %s356, 32
          %s358 = scalar_lea.hbm %s2, %s357
          %s360 = sshll.u32 %s348, 4
          %s361 = int_to_ptr.vmem [resolvable:$true] %s360
          %363 = dma.vmem_to_hbm [thread:$0]  %s361, 32, %s358, %s345
        $region48: #{tpu_custom_call.1} parent=27 // pred_fallthru
          _
      $region28: #{tpu_custom_call.1} parent=5 // pred_fallthru
        _
      %p364 = scmp.le.s32.totalorder 2, %s17
      // Predicated region
      $region49: #{tpu_custom_call.1} parent=5 // pred_check
        %p365 = pneg %p364
      $region50: #{tpu_custom_call.1} parent=5 // pred_check_branch
        %367 = sbr.rel (%p365) target = $region52
      $region51: #{tpu_custom_call.1} parent=5 // pred_region
        %s368 = ssub.s32 %s17, 2
        // Predicated region
        $region53: #{tpu_custom_call.1} parent=51 // pred_check
          %p369 = pneg %p135
        $region54: #{tpu_custom_call.1} parent=51 // pred_check_branch
          %371 = sbr.rel (%p369) target = $region56
        $region55: #{tpu_custom_call.1} parent=51 // pred_region
          %s372 = sand.u32 %s120, 1
          %s373 = scalar_lea.sflag [#allocation5], %s372
          %s374 = sand.u32 %s120, 1
          %s375 = smul.addr %s374, 2
          %s376 = scalar_lea.vmem [#allocation8], %s375
          %377 = dma.done %s373, 32
        $region56: #{tpu_custom_call.1} parent=51 // pred_fallthru
          _
      $region52: #{tpu_custom_call.1} parent=5 // pred_fallthru
        _
    $region6: #{tpu_custom_call.1} parent=1 // loop_footer
      %s21 = sadd.s32 1, %s17
    $region7: #{tpu_custom_call.1} parent=1 // loop_footer_branch
      %16 = sbr.rel target = $region3
    $region8: #{tpu_custom_call.1} parent=1 // loop_exit
      _
    %378 = vsyncpa [#allocation4], 1
    %s379 = scalar_lea.sflag [#allocation4], 1
    %380 = vsyncpa %s379, 1
    %381 = vsyncpa [#allocation7], 1
    %s382 = scalar_lea.sflag [#allocation7], 1
    %383 = vsyncpa %s382, 1
    %384 = vsyncpa [#allocation5], 1
    %s385 = scalar_lea.sflag [#allocation5], 1
    %386 = vsyncpa %s385, 1

</llo_original>
